<compile_context>
chip_gen: v7x
topology: tpu7x:2x2x1
jax: 0.10.0
libtpu: 0.0.40
codegen_flags: <defaults>
</compile_context>

<pallas_src>
import functools

import jax
import jax.numpy as jnp
from jax.experimental import pallas as pl
from jax.experimental.pallas import tpu as pltpu


def _round_up(x: int, m: int) -> int:
    return (x + m - 1) // m * m


def _merge_token_head_kernel(tok_ref, mask_ref, out_ref, *, heads, group, depth):
    # tok_ref : (Bt, H, tn, L)      L = group * depth (lane-dense when depth < 128)
    # mask_ref: (Bt, tn, H*group)   float32, heads (x group-slot) on lanes
    # out_ref : (Bt, tn, L)
    bt, _, tn, L = tok_ref.shape

    if group > 1:
        # Constant selection matrix: expand[j, l] = 1 iff lane l belongs to
        # group-slot j (j*depth <= l < (j+1)*depth).  Applied on the MXU so the
        # lane expansion of the mask stays off the VPU / store path.
        lane = jax.lax.broadcasted_iota(jnp.int32, (group, L), 1)
        row = jax.lax.broadcasted_iota(jnp.int32, (group, L), 0)
        lo = row * depth
        expand = ((lane >= lo) & (lane < lo + depth)).astype(jnp.float32)

    for b in range(bt):                        # short static loop (bt <= 8)
        acc = jnp.zeros((tn, L), jnp.float32)
        cnt = jnp.zeros((tn, L) if group > 1 else (tn, 1), jnp.float32)
        for h in range(heads):                 # short static loop over heads
            tok_h = tok_ref[b, h].astype(jnp.float32)              # (tn, L)
            m_small = mask_ref[b, :, h * group:(h + 1) * group]    # (tn, group)
            if group > 1:
                m_h = jnp.dot(m_small, expand,
                              preferred_element_type=jnp.float32)  # (tn, L)
            else:
                m_h = m_small                  # (tn, 1): free lane splat broadcast
            acc = acc + tok_h * m_h
            cnt = cnt + m_h
        # One divide per slot (per lane when grouped); approx=False keeps the
        # 0-valid-heads case at 0 * inf = NaN, matching PyTorch's 0/0.
        inv = pl.reciprocal(cnt, approx=False)
        out_ref[b] = (acc * inv).astype(out_ref.dtype)


def _vmem_capacity_bytes() -> int:
    try:
        return int(pltpu.get_tpu_info().vmem_capacity_bytes)
    except Exception:
        return 64 << 20            # conservative fallback (v7x per-core VMEM)


def _pick_tiles(B, H, n_rows, lane_dim, mask_lanes, itemsize, sublane):
    """Choose (Bt, tn, vmem_limit_bytes) with honest double-buffered VMEM
    accounting: lane padding to 128, sublane/dtype padding, f32 temporaries."""
    cap = _vmem_capacity_bytes()
    if cap >= (96 << 20):          # v5e / v6e: 128 MiB physical VMEM
        budget = 48 << 20
    else:                          # v7x: 64 MiB per TensorCore
        budget = 24 << 20
    target_tok_bytes = 2 << 20     # ~2 MiB of token data per step is plenty

    Lp = _round_up(lane_dim, 128)
    Mp = _round_up(mask_lanes, 128)

    def footprint(bt, tn):
        tnp = _round_up(tn, sublane)
        tok = bt * H * tnp * Lp * itemsize        # token input block
        msk = bt * tnp * Mp * 4                   # mask block (f32, lane-padded)
        out = bt * tnp * Lp * itemsize            # output block
        f32_live = 4 * bt * tnp * Lp * 4          # acc/cnt/tok_h/m_h f32 temps
        return 2 * (tok + msk + out) + f32_live   # in/out are double-buffered

    def tok_bytes(bt, tn):
        return bt * H * tn * Lp * itemsize

    # Legal n-tiles: dtype-packing multiples dividing n_rows, or full n_rows.
    tn_opts = sorted({t for t in range(sublane, n_rows, sublane) if n_rows % t == 0}
                     | {n_rows}, reverse=True)
    tn = next((t for t in tn_opts if footprint(1, t) <= budget), min(tn_opts))

    # Keep >= 2 grid steps when possible: v7x shards parallel axes over 2 TCs.
    if B * (n_rows // tn) < 2:
        smaller = [t for t in tn_opts if t < tn]
        if smaller:
            tn = smaller[0]

    # Merge batch elements per step to amortize the ~0.35 us grid overhead,
    # while the footprint fits, the grid keeps >= 2 steps, and the in-kernel
    # unrolled batch loop stays short.
    bt = 1
    grid_n = n_rows // tn
    for cand in sorted(c for c in range(2, min(B, 8) + 1) if B % c == 0):
        if footprint(cand, tn) > budget:
            break
        if (B // cand) * grid_n < 2 and B * grid_n >= 2:
            break
        bt = cand
        if tok_bytes(bt, tn) >= target_tok_bytes:
            break

    vmem_limit = min(cap * 3 // 4, max(32 << 20, footprint(bt, tn) + (8 << 20)))
    return bt, tn, vmem_limit


def merge_token_head(tokens: jax.Array, valid_mask: jax.Array, t_heads: int):
    """tokens: (B, T, d) float; valid_mask: (B, T) bool; T = t_heads * n."""
    B, T, d = tokens.shape
    assert T % t_heads == 0, "T must be divisible by t_heads"
    H = t_heads
    n = T // H

    # Lane-dense grouping: pack g = 128//d token slots into one 128-lane row so
    # loads/stores use full vregs when d < 128.
    g = 1
    if d < 128 and 128 % d == 0 and n % (128 // d) == 0:
        g = 128 // d
    n_rows = n // g
    L = g * d
    mask_lanes = H * g

    # Free reshape: (n, d) is contiguous, so (B, H, n, d) == (B, H, n/g, g*d).
    tok_in = tokens.reshape(B, H, n_rows, L)
    # Mask with heads (x group-slot) on the lane axis; tiny XLA transpose.
    mask_in = (valid_mask.reshape(B, H, n_rows, g)
               .transpose(0, 2, 1, 3)
               .reshape(B, n_rows, mask_lanes)
               .astype(jnp.float32))

    itemsize = jnp.dtype(tokens.dtype).itemsize
    sublane = max(8, 32 // itemsize)               # 8 f32 / 16 bf16 / 32 int8
    Bt, tn, vmem_limit = _pick_tiles(B, H, n_rows, L, mask_lanes, itemsize, sublane)

    grid_b = B // Bt
    grid_n = n_rows // tn

    kernel = functools.partial(_merge_token_head_kernel, heads=H, group=g, depth=d)

    if grid_n > grid_b:            # longer parallel axis first (megacore sharding)
        grid = (grid_n, grid_b)
        tok_spec = pl.BlockSpec((Bt, H, tn, L), lambda ni, bi: (bi, 0, ni, 0))
        msk_spec = pl.BlockSpec((Bt, tn, mask_lanes), lambda ni, bi: (bi, ni, 0))
        out_spec = pl.BlockSpec((Bt, tn, L), lambda ni, bi: (bi, ni, 0))
    else:
        grid = (grid_b, grid_n)
        tok_spec = pl.BlockSpec((Bt, H, tn, L), lambda bi, ni: (bi, 0, ni, 0))
        msk_spec = pl.BlockSpec((Bt, tn, mask_lanes), lambda bi, ni: (bi, ni, 0))
        out_spec = pl.BlockSpec((Bt, tn, L), lambda bi, ni: (bi, ni, 0))

    cost = pl.CostEstimate(
        flops=3 * B * T * d,
        transcendentals=0,
        bytes_accessed=(B * T * d * itemsize       # tokens in
                        + B * n * H * 4            # mask in (f32)
                        + B * n * d * itemsize))   # tokens out

    out = pl.pallas_call(
        kernel,
        out_shape=jax.ShapeDtypeStruct((B, n_rows, L), tokens.dtype),
        grid=grid,
        in_specs=[tok_spec, msk_spec],
        out_specs=out_spec,
        compiler_params=pltpu.CompilerParams(
            dimension_semantics=("parallel", "parallel"),
            vmem_limit_bytes=vmem_limit),
        cost_estimate=cost,
    )(tok_in, mask_in)

    out_tok = out.reshape(B, n, d)
    # Boolean output mask (any valid head per slot): lane-sparse and trivial,
    # cheapest done in XLA rather than as masked partial stores in the kernel.
    out_mask = jnp.any(valid_mask.reshape(B, H, n), axis=1)
    return out_tok, out_mask


def _reference(tokens, valid_mask, t_heads):
    B, T, d = tokens.shape
    n = T // t_heads
    tok = tokens.reshape(B, t_heads, n, d)
    m = valid_mask.reshape(B, t_heads, n, 1).astype(tokens.dtype)
    tok = tok * m
    cnt = m.sum(1)
    out = tok.sum(1) / cnt
    return out, (cnt.squeeze(2) >= 1)


if __name__ == "__main__":
    # Small shapes consistent with the forward: B=2, t_heads=4, n=8, d=32 -> T=32.
    B, t_heads, n, d = 2, 4, 8, 32
    T = t_heads * n

    key = jax.random.PRNGKey(0)
    k_tok, k_mask = jax.random.split(key)
    tokens = jax.random.normal(k_tok, (B, T, d), dtype=jnp.float32)
    valid_mask = jax.random.bernoulli(k_mask, 0.7, (B, t_heads, n))
    # Ensure at least one valid head per token slot (avoid 0/0 NaNs in the demo).
    valid_mask = valid_mask.at[:, 0, :].set(True)
    valid_mask = valid_mask.reshape(B, T)

    out_tok, out_mask = merge_token_head(tokens, valid_mask, t_heads)
    jax.block_until_ready((out_tok, out_mask))

    ref_tok, ref_mask = _reference(tokens, valid_mask, t_heads)
    assert out_tok.shape == (B, n, d) and out_mask.shape == (B, n)
    assert jnp.allclose(out_tok, ref_tok, atol=1e-5, rtol=1e-5)
    assert jnp.array_equal(out_mask, ref_mask)

    print("KERNEL_OK")
</pallas_src>

<mosaic_0001>
module attributes {stable_mosaic.version = 11 : i64} {
  func.func @_merge_token_head_kernel(%arg0: i32, %arg1: i32, %arg2: memref<1x4x2x128xf32, #tpu.memory_space<vmem>>, %arg3: memref<1x2x16xf32, #tpu.memory_space<vmem>>, %arg4: memref<1x2x128xf32, #tpu.memory_space<vmem>>) attributes {dimension_semantics = [#tpu.dimension_semantics<parallel>, #tpu.dimension_semantics<parallel>], iteration_bounds = array<i64: 2, 1>, scalar_prefetch = 0 : i64, scratch_operands = 0 : i64, tpu.core_type = #tpu.core_type<tc>, window_params = [{transform_indices = @transform_0, window_bounds = array<i64: 1, 4, 2, 128>}, {transform_indices = @transform_1, window_bounds = array<i64: 1, 2, 16>}, {transform_indices = @transform_2, window_bounds = array<i64: 1, 2, 128>}]} {
    %0 = tpu.iota {dimensions = array<i32: 1>} : vector<4x128xi32>
    %1 = tpu.iota {dimensions = array<i32: 0>} : vector<4x128xi32>
    %c32_i32 = arith.constant 32 : i32
    %2 = vector.broadcast %c32_i32 : i32 to vector<4x128xi32>
    %3 = arith.muli %1, %2 : vector<4x128xi32>
    %4 = arith.cmpi sge, %0, %3 : vector<4x128xi32>
    %c32_i32_0 = arith.constant 32 : i32
    %5 = vector.broadcast %c32_i32_0 : i32 to vector<4x128xi32>
    %6 = arith.addi %3, %5 : vector<4x128xi32>
    %7 = arith.cmpi slt, %0, %6 : vector<4x128xi32>
    %8 = arith.andi %4, %7 : vector<4x128xi1>
    %9 = arith.extui %8 : vector<4x128xi1> to vector<4x128xi32>
    %10 = arith.sitofp %9 : vector<4x128xi32> to vector<4x128xf32>
    %cst = arith.constant 0.000000e+00 : f32
    %11 = vector.broadcast %cst : f32 to vector<2x128xf32>
    %cst_1 = arith.constant 0.000000e+00 : f32
    %12 = vector.broadcast %cst_1 : f32 to vector<2x128xf32>
    %c0 = arith.constant 0 : index
    %c0_2 = arith.constant 0 : index
    %c0_3 = arith.constant 0 : index
    %c0_4 = arith.constant 0 : index
    %13 = vector.load %arg2[%c0, %c0_2, %c0_3, %c0_4] : memref<1x4x2x128xf32, #tpu.memory_space<vmem>>, vector<1x1x2x128xf32>
    %14 = vector.shape_cast %13 : vector<1x1x2x128xf32> to vector<2x128xf32>
    %c0_5 = arith.constant 0 : index
    %c0_6 = arith.constant 0 : index
    %c0_7 = arith.constant 0 : index
    %15 = vector.load %arg3[%c0_5, %c0_6, %c0_7] : memref<1x2x16xf32, #tpu.memory_space<vmem>>, vector<1x2x4xf32>
    %16 = vector.shape_cast %15 : vector<1x2x4xf32> to vector<2x4xf32>
    %cst_8 = arith.constant dense<0.000000e+00> : vector<2x128xf32>
    %17 = tpu.matmul %16, %10, %cst_8 {dimension_numbers = #tpu.dot_dimension_numbers<[1], [0], [0], [1], [0, 0, 1, 1], [], []>} : vector<2x4xf32>, vector<4x128xf32>, vector<2x128xf32> -> vector<2x128xf32>
    %18 = arith.mulf %14, %17 : vector<2x128xf32>
    %19 = arith.addf %11, %18 : vector<2x128xf32>
    %20 = arith.addf %12, %17 : vector<2x128xf32>
    %c0_9 = arith.constant 0 : index
    %c1 = arith.constant 1 : index
    %c0_10 = arith.constant 0 : index
    %c0_11 = arith.constant 0 : index
    %21 = vector.load %arg2[%c0_9, %c1, %c0_10, %c0_11] : memref<1x4x2x128xf32, #tpu.memory_space<vmem>>, vector<1x1x2x128xf32>
    %22 = vector.shape_cast %21 : vector<1x1x2x128xf32> to vector<2x128xf32>
    %c0_12 = arith.constant 0 : index
    %c0_13 = arith.constant 0 : index
    %c4 = arith.constant 4 : index
    %23 = vector.load %arg3[%c0_12, %c0_13, %c4] : memref<1x2x16xf32, #tpu.memory_space<vmem>>, vector<1x2x4xf32>
    %24 = vector.shape_cast %23 : vector<1x2x4xf32> to vector<2x4xf32>
    %cst_14 = arith.constant dense<0.000000e+00> : vector<2x128xf32>
    %25 = tpu.matmul %24, %10, %cst_14 {dimension_numbers = #tpu.dot_dimension_numbers<[1], [0], [0], [1], [0, 0, 1, 1], [], []>} : vector<2x4xf32>, vector<4x128xf32>, vector<2x128xf32> -> vector<2x128xf32>
    %26 = arith.mulf %22, %25 : vector<2x128xf32>
    %27 = arith.addf %19, %26 : vector<2x128xf32>
    %28 = arith.addf %20, %25 : vector<2x128xf32>
    %c0_15 = arith.constant 0 : index
    %c2 = arith.constant 2 : index
    %c0_16 = arith.constant 0 : index
    %c0_17 = arith.constant 0 : index
    %29 = vector.load %arg2[%c0_15, %c2, %c0_16, %c0_17] : memref<1x4x2x128xf32, #tpu.memory_space<vmem>>, vector<1x1x2x128xf32>
    %30 = vector.shape_cast %29 : vector<1x1x2x128xf32> to vector<2x128xf32>
    %c0_18 = arith.constant 0 : index
    %c0_19 = arith.constant 0 : index
    %c8 = arith.constant 8 : index
    %31 = vector.load %arg3[%c0_18, %c0_19, %c8] : memref<1x2x16xf32, #tpu.memory_space<vmem>>, vector<1x2x4xf32>
    %32 = vector.shape_cast %31 : vector<1x2x4xf32> to vector<2x4xf32>
    %cst_20 = arith.constant dense<0.000000e+00> : vector<2x128xf32>
    %33 = tpu.matmul %32, %10, %cst_20 {dimension_numbers = #tpu.dot_dimension_numbers<[1], [0], [0], [1], [0, 0, 1, 1], [], []>} : vector<2x4xf32>, vector<4x128xf32>, vector<2x128xf32> -> vector<2x128xf32>
    %34 = arith.mulf %30, %33 : vector<2x128xf32>
    %35 = arith.addf %27, %34 : vector<2x128xf32>
    %36 = arith.addf %28, %33 : vector<2x128xf32>
    %c0_21 = arith.constant 0 : index
    %c3 = arith.constant 3 : index
    %c0_22 = arith.constant 0 : index
    %c0_23 = arith.constant 0 : index
    %37 = vector.load %arg2[%c0_21, %c3, %c0_22, %c0_23] : memref<1x4x2x128xf32, #tpu.memory_space<vmem>>, vector<1x1x2x128xf32>
    %38 = vector.shape_cast %37 : vector<1x1x2x128xf32> to vector<2x128xf32>
    %c0_24 = arith.constant 0 : index
    %c0_25 = arith.constant 0 : index
    %c12 = arith.constant 12 : index
    %39 = vector.load %arg3[%c0_24, %c0_25, %c12] : memref<1x2x16xf32, #tpu.memory_space<vmem>>, vector<1x2x4xf32>
    %40 = vector.shape_cast %39 : vector<1x2x4xf32> to vector<2x4xf32>
    %cst_26 = arith.constant dense<0.000000e+00> : vector<2x128xf32>
    %41 = tpu.matmul %40, %10, %cst_26 {dimension_numbers = #tpu.dot_dimension_numbers<[1], [0], [0], [1], [0, 0, 1, 1], [], []>} : vector<2x4xf32>, vector<4x128xf32>, vector<2x128xf32> -> vector<2x128xf32>
    %42 = arith.mulf %38, %41 : vector<2x128xf32>
    %43 = arith.addf %35, %42 : vector<2x128xf32>
    %44 = arith.addf %36, %41 : vector<2x128xf32>
    %45 = tpu.reciprocal %44 : vector<2x128xf32> -> vector<2x128xf32>
    %46 = arith.mulf %43, %45 : vector<2x128xf32>
    %c0_27 = arith.constant 0 : index
    %c0_28 = arith.constant 0 : index
    %c0_29 = arith.constant 0 : index
    %47 = vector.load %arg4[%c0_27, %c0_28, %c0_29] : memref<1x2x128xf32, #tpu.memory_space<vmem>>, vector<1x2x128xf32>
    %48 = vector.shape_cast %47 : vector<1x2x128xf32> to vector<2x128xf32>
    %49 = vector.shape_cast %46 : vector<2x128xf32> to vector<1x2x128xf32>
    tpu.vector_store %arg4[%c0_27, %c0_28, %c0_29], %49 {strides = array<i32>} : memref<1x2x128xf32, #tpu.memory_space<vmem>>, vector<1x2x128xf32>,
    return
  }
  func.func @transform_0(%arg0: i32, %arg1: i32) -> (i32, i32, i32, i32) {
    %c0_i32 = arith.constant 0 : i32
    %c0_i32_0 = arith.constant 0 : i32
    %c0_i32_1 = arith.constant 0 : i32
    return %arg0, %c0_i32, %arg1, %c0_i32_0 : i32, i32, i32, i32
  }
  func.func @transform_1(%arg0: i32, %arg1: i32) -> (i32, i32, i32) {
    %c0_i32 = arith.constant 0 : i32
    %c0_i32_0 = arith.constant 0 : i32
    return %arg0, %arg1, %c0_i32 : i32, i32, i32
  }
  func.func @transform_2(%arg0: i32, %arg1: i32) -> (i32, i32, i32) {
    %c0_i32 = arith.constant 0 : i32
    %c0_i32_0 = arith.constant 0 : i32
    return %arg0, %arg1, %c0_i32 : i32, i32, i32
  }
}

</mosaic_0001>

<llo_original>
// kernel: tpu_custom_call.1
$region0: #{tpu_custom_call.1}
  #allocation0 [shape = 'u32[]', space=smem, size = 0x4, offset = 0x4, fixed_abs, tag = 'smem constant byte address 0x4 - core index']
  #allocation1 [shape = 'u32[144,128]{1,0:T(1,128)}', space=vmem, size = 0x12000, scoped, tag = 'internal scratch']
  %s0 = inlined_call_operand.hbm [shape: f32[2,4,2,128], index: 0, kind: input, shape index: {}]
  %s1 = inlined_call_operand.hbm [shape: f32[2,2,16], index: 1, kind: input, shape index: {}]
  %s2 = inlined_call_operand.hbm [shape: f32[2,2,128], index: 2, kind: output, shape index: {}]
  %s3 = sld [smem:[#allocation0]]
  $region49: #{tpu_custom_call.1} parent=0
    _
  %s5 = ssub.s32 1, %s3
  %s6 = scalar_select 0, %s5, %s3
  $region1: #{tpu_custom_call.1} parent=0
    #allocation2 [shape = 'u8[8192]{0}', space=vmem, size = 0x2000, scoped, tag = 'input window, operand 0']
    #allocation3 [shape = 's32[2]{0}', space=sflag, size = 0x8, scoped, tag = 'scoped memory for tpu_custom_call.1']
    #allocation4 [shape = 's32[2]{0}', space=sflag, size = 0x8, scoped, tag = 'scoped memory for tpu_custom_call.1']
    #allocation5 [shape = 'u8[2048]{0}', space=vmem, size = 0x800, scoped, tag = 'input window, operand 1']
    #allocation6 [shape = 's32[2]{0}', space=sflag, size = 0x8, scoped, tag = 'scoped memory for tpu_custom_call.1']
    #allocation7 [shape = 'u8[2048]{0}', space=vmem, size = 0x800, scoped, tag = 'output window, operand 0']
    %7 = vsyncpa [#allocation3], 0
    %s8 = scalar_lea.sflag [#allocation3], 1
    %9 = vsyncpa %s8, 0
    %10 = vsyncpa [#allocation6], 0
    %s11 = scalar_lea.sflag [#allocation6], 1
    %12 = vsyncpa %s11, 0
    %13 = vsyncpa [#allocation4], 0
    %s14 = scalar_lea.sflag [#allocation4], 1
    %15 = vsyncpa %s14, 0
    loop: start=0, step=1, limit=4
    $region2: #{tpu_custom_call.1} parent=1 // loop_pre_header
      _
    $region3: #{tpu_custom_call.1} parent=1 // loop_header
      %s17 = sphi 0, %s21
      %p18 = scmp.ge.s32.totalorder %s17, 4
      %s24 = sphi 0, %s36
      %s25 = sphi 0, %s32
      %s26 = sphi 0, %s24
      %s27 = sphi 0, %s25
      %s28 = sphi 0, %s26
      %s29 = sphi 0, %s27
      %s41 = sphi 0, %s43
      %s44 = sphi 0, %s41
      %s45 = sphi 0, %s44
      %s61 = sphi 0, %s45
      %s69 = sphi 0, %s71
      %s72 = sphi 0, %s69
      %s73 = sphi 0, %s72
      %s89 = sphi 0, %s73
      %s97 = sphi 0, %s99
      %s100 = sphi 0, %s97
      %s101 = sphi 0, %s100
      %s117 = sphi 0, %s101
    $region4: #{tpu_custom_call.1} parent=1 // loop_header_branch
      %20 = sbr.rel (%p18) target = $region8
    $region5: #{tpu_custom_call.1} parent=1 // loop_body
      %s22 = ssub.s32 %s17, 1
      %s23 = ssub.s32 %s17, 2
      %s30 = sadd.s32 1, %s25
      %p31 = scmp.ge.s32.totalorder %s30, 1
      %s32 = scalar_select %p31, 0, %s30
      %s33 = sadd.s32 1, %s24
      %s34 = scalar_select %p31, %s33, %s24
      %p35 = scmp.ge.s32.totalorder %s34, 2
      %s36 = scalar_select %p35, 0, %s34
      %s37 = ssub.s32 %s24, %s36
      %s38 = ssub.s32 %s25, %s32
      %s39 = sor.u32 %s37, %s38
      %p40 = scmp.eq.s32.totalorder %s39, 0
      %s42 = sadd.s32 %s41, 1
      %s43 = scalar_select %p40, %s41, %s42
      %p46 = pneg %p40
      %p47 = scmp.eq.s32.totalorder %s17, 1
      %p48 = por %p46, %p47
      %p49 = scmp.ne.s32.totalorder %s41, %s44
      %p50 = scmp.eq.s32.totalorder %s17, 0
      %p51 = por %p49, %p50
      %p52 = scmp.ne.s32.totalorder %s41, %s44
      %p53 = scmp.eq.s32.totalorder %s22, 1
      %p54 = por %p52, %p53
      %p55 = scmp.ne.s32.totalorder %s44, %s45
      %p56 = scmp.eq.s32.totalorder %s22, 0
      %p57 = por %p55, %p56
      %p58 = scmp.ne.s32.totalorder %s44, %s45
      %p59 = scmp.eq.s32.totalorder %s23, 1
      %p60 = por %p58, %p59
      %p62 = scmp.ne.s32.totalorder %s45, %s61
      %p63 = scmp.eq.s32.totalorder %s23, 0
      %p64 = por %p62, %p63
      %s65 = ssub.s32 %s24, %s36
      %s66 = ssub.s32 %s25, %s32
      %s67 = sor.u32 %s65, %s66
      %p68 = scmp.eq.s32.totalorder %s67, 0
      %s70 = sadd.s32 %s69, 1
      %s71 = scalar_select %p68, %s69, %s70
      %p74 = pneg %p68
      %p75 = scmp.eq.s32.totalorder %s17, 1
      %p76 = por %p74, %p75
      %p77 = scmp.ne.s32.totalorder %s69, %s72
      %p78 = scmp.eq.s32.totalorder %s17, 0
      %p79 = por %p77, %p78
      %p80 = scmp.ne.s32.totalorder %s69, %s72
      %p81 = scmp.eq.s32.totalorder %s22, 1
      %p82 = por %p80, %p81
      %p83 = scmp.ne.s32.totalorder %s72, %s73
      %p84 = scmp.eq.s32.totalorder %s22, 0
      %p85 = por %p83, %p84
      %p86 = scmp.ne.s32.totalorder %s72, %s73
      %p87 = scmp.eq.s32.totalorder %s23, 1
      %p88 = por %p86, %p87
      %p90 = scmp.ne.s32.totalorder %s73, %s89
      %p91 = scmp.eq.s32.totalorder %s23, 0
      %p92 = por %p90, %p91
      %s93 = ssub.s32 %s24, %s36
      %s94 = ssub.s32 %s25, %s32
      %s95 = sor.u32 %s93, %s94
      %p96 = scmp.eq.s32.totalorder %s95, 0
      %s98 = sadd.s32 %s97, 1
      %s99 = scalar_select %p96, %s97, %s98
      %p102 = pneg %p96
      %p103 = scmp.eq.s32.totalorder %s17, 1
      %p104 = por %p102, %p103
      %p105 = scmp.ne.s32.totalorder %s97, %s100
      %p106 = scmp.eq.s32.totalorder %s17, 0
      %p107 = por %p105, %p106
      %p108 = scmp.ne.s32.totalorder %s97, %s100
      %p109 = scmp.eq.s32.totalorder %s22, 1
      %p110 = por %p108, %p109
      %p111 = scmp.ne.s32.totalorder %s100, %s101
      %p112 = scmp.eq.s32.totalorder %s22, 0
      %p113 = por %p111, %p112
      %p114 = scmp.ne.s32.totalorder %s100, %s101
      %p115 = scmp.eq.s32.totalorder %s23, 1
      %p116 = por %p114, %p115
      %p118 = scmp.ne.s32.totalorder %s101, %s117
      %p119 = scmp.eq.s32.totalorder %s23, 0
      %p120 = por %p118, %p119
      %p121 = scmp.le.s32.totalorder 1, %s17
      %p122 = scmp.lt.s32.totalorder %s17, 3
      %p123 = pnand %p121, %p122
      %p124 = pneg %p123
      // Predicated region
      $region9: #{tpu_custom_call.1} parent=5 // pred_check
        _
      $region10: #{tpu_custom_call.1} parent=5 // pred_check_branch
        %126 = sbr.rel (%p123) target = $region12
      $region11: #{tpu_custom_call.1} parent=5 // pred_region
        %s127 = ssub.s32 %s17, 1
      $region12: #{tpu_custom_call.1} parent=5 // pred_fallthru
        _
      %p128 = scmp.lt.s32.totalorder %s17, 2
      // Predicated region
      $region13: #{tpu_custom_call.1} parent=5 // pred_check
        %p129 = pneg %p128
      $region14: #{tpu_custom_call.1} parent=5 // pred_check_branch
        %131 = sbr.rel (%p129) target = $region16
      $region15: #{tpu_custom_call.1} parent=5 // pred_region
        // Predicated region
        $region17: #{tpu_custom_call.1} parent=15 // pred_check
          %p132 = pneg %p51
        $region18: #{tpu_custom_call.1} parent=15 // pred_check_branch
          %134 = sbr.rel (%p132) target = $region20
        $region19: #{tpu_custom_call.1} parent=15 // pred_region
          %s135 = sand.u32 %s41, 1
          %s136 = scalar_lea.sflag [#allocation3], %s135
          %s137 = sand.u32 %s41, 1
          %s138 = smul.addr %s137, 8
          %s139 = scalar_lea.vmem [#allocation2], %s138
          %s141 = ssub.s32 128, 128
          %142 = vsyncadd %s136, %s141
          %s143 = smul.addr %s24, 4
          %s144 = sadd.s32 %s25, %s143
          %s145 = smul.addr %s144, 32
          %s146 = scalar_lea.hbm %s0, %s145
          %s147 = sshll.u32 %s139, 4
          %s148 = int_to_ptr.vmem [resolvable:$true] %s147
          %153 = dma.hbm_to_vmem [thread:$0]  %s146, 128, %s148, %s136, 32, 32, 2
        $region20: #{tpu_custom_call.1} parent=15 // pred_fallthru
          _
        // Predicated region
        $region21: #{tpu_custom_call.1} parent=15 // pred_check
          %p154 = pneg %p79
        $region22: #{tpu_custom_call.1} parent=15 // pred_check_branch
          %156 = sbr.rel (%p154) target = $region24
        $region23: #{tpu_custom_call.1} parent=15 // pred_region
          %s157 = sand.u32 %s69, 1
          %s158 = scalar_lea.sflag [#allocation6], %s157
          %s159 = sand.u32 %s69, 1
          %s160 = smul.addr %s159, 2
          %s161 = scalar_lea.vmem [#allocation5], %s160
          %s163 = ssub.s32 32, 32
          %164 = vsyncadd %s158, %s163
          %s165 = sadd.s32 %s25, %s24
          %s166 = smul.addr %s165, 32
          %s167 = scalar_lea.hbm %s1, %s166
          %s169 = sshll.u32 %s161, 4
          %s170 = int_to_ptr.vmem [resolvable:$true] %s169
          %172 = dma.hbm_to_vmem [thread:$0]  %s167, 32, %s170, %s158
        $region24: #{tpu_custom_call.1} parent=15 // pred_fallthru
          _
      $region16: #{tpu_custom_call.1} parent=5 // pred_fallthru
        _
      %p173 = scmp.le.s32.totalorder 1, %s17
      %p174 = scmp.lt.s32.totalorder %s17, 3
      %p175 = pnand %p173, %p174
      %p176 = pneg %p175
      // Predicated region
      $region25: #{tpu_custom_call.1} parent=5 // pred_check
        _
      $region26: #{tpu_custom_call.1} parent=5 // pred_check_branch
        %178 = sbr.rel (%p175) target = $region28
      $region27: #{tpu_custom_call.1} parent=5 // pred_region
        %s179 = ssub.s32 %s17, 1
        %s180 = sand.u32 %s44, 1
        %s181 = scalar_lea.sflag [#allocation3], %s180
        %s182 = sand.u32 %s44, 1
        %s183 = smul.addr %s182, 8
        %s184 = scalar_lea.vmem [#allocation2], %s183
        // Predicated region
        $region29: #{tpu_custom_call.1} parent=27 // pred_check
          %p185 = pneg %p57
        $region30: #{tpu_custom_call.1} parent=27 // pred_check_branch
          %187 = sbr.rel (%p185) target = $region32
        $region31: #{tpu_custom_call.1} parent=27 // pred_region
          %188 = dma.done %s181, 128
        $region32: #{tpu_custom_call.1} parent=27 // pred_fallthru
          _
        %s189 = sand.u32 %s72, 1
        %s190 = scalar_lea.sflag [#allocation6], %s189
        %s191 = sand.u32 %s72, 1
        %s192 = smul.addr %s191, 2
        %s193 = scalar_lea.vmem [#allocation5], %s192
        // Predicated region
        $region33: #{tpu_custom_call.1} parent=27 // pred_check
          %p194 = pneg %p85
        $region34: #{tpu_custom_call.1} parent=27 // pred_check_branch
          %196 = sbr.rel (%p194) target = $region36
        $region35: #{tpu_custom_call.1} parent=27 // pred_region
          %197 = dma.done %s190, 32
        $region36: #{tpu_custom_call.1} parent=27 // pred_fallthru
          _
        %s198 = sand.u32 %s44, 1
        %s199 = scalar_lea.sflag [#allocation3], %s198
        %s200 = sand.u32 %s44, 1
        %s201 = smul.addr %s200, 8
        %s202 = scalar_lea.vmem [#allocation2], %s201
        %p203 = pneg %p57
        %p204 = pneg %p54
        %s205 = sand.u32 %s72, 1
        %s206 = scalar_lea.sflag [#allocation6], %s205
        %s207 = sand.u32 %s72, 1
        %s208 = smul.addr %s207, 2
        %s209 = scalar_lea.vmem [#allocation5], %s208
        %p210 = pneg %p85
        %p211 = pneg %p82
        %p212 = pneg %p113
        %p213 = pneg %p110
        %s214 = sand.u32 %s100, 1
        %s215 = scalar_lea.sflag [#allocation4], %s214
        %s216 = sand.u32 %s100, 1
        %s217 = smul.addr %s216, 2
        %s218 = scalar_lea.vmem [#allocation7], %s217
        %v219 = vlaneseq
        %v220 = vand.u32 %v219, 127
        %v221 = vlaneseq
        %v222 = vshrl.u32 %v221, 7
        %v223 = vmul.u32 %v222, 32
        %vm224 = vcmp.ge.s32.totalorder %v220, %v223
        %v225 = vadd.s32 %v223, 32
        %vm226 = vcmp.lt.s32.totalorder %v220, %v225
        %vm227 = vmand %vm224, %vm226
        %v228 = vsel %vm227, 1, 0
        %v229 = vcvt.s32.f32 %v228
        %v230 = vld [vmem:[%s184] sm:$0x3]
        %v231 = vld [vmem:[%s193] sm:$0x3]
        %vm232 = vcmask 31744
        %v234 = vsel %vm232, %v231, 0
        %vm236 = vcmask 1043456
        %v238 = vsel %vm236, %v229, 0
        %240 = vmatprep.subr.mxu0 0.0
        %241 = vmatpush1.msra.mxu0 %v238
        %242 = vmatprep.subr.mxu0 0.0
        %243 = vmatpush1.msra.mxu0 0.0
        %244 = vmatprep.subr.mxu0 0.0
        %245 = vmatpush1.msra.mxu0 0.0
        %246 = vmatprep.subr.mxu0 0.0
        %247 = vmatpush1.msra.mxu0 0.0
        %248 = vmatprep.subr.mxu0 0.0
        %249 = vmatpush1.msra.mxu0 0.0
        %250 = vmatprep.subr.mxu0 0.0
        %251 = vmatpush1.msra.mxu0 0.0
        %252 = vmatprep.subr.mxu0 0.0
        %253 = vmatpush1.msra.mxu0 0.0
        %254 = vmatprep.subr.mxu0 0.0
        %255 = vmatpush1.msra.mxu0 0.0
        %256 = vmatprep.subr.mxu0 0.0
        %257 = vmatpush1.msra.mxu0 0.0
        %258 = vmatprep.subr.mxu0 0.0
        %259 = vmatpush1.msra.mxu0 0.0
        %260 = vmatprep.subr.mxu0 0.0
        %261 = vmatpush1.msra.mxu0 0.0
        %262 = vmatprep.subr.mxu0 0.0
        %263 = vmatpush1.msra.mxu0 0.0
        %264 = vmatprep.subr.mxu0 0.0
        %265 = vmatpush1.msra.mxu0 0.0
        %266 = vmatprep.subr.mxu0 0.0
        %267 = vmatpush1.msra.mxu0 0.0
        %268 = vmatprep.subr.mxu0 0.0
        %269 = vmatpush1.msra.mxu0 0.0
        %270 = vmatprep.subr.mxu0 0.0
        %271 = vmatpush1.msra.mxu0 0.0
        %272 = vmatprep.subr.mxu0 0.0
        %273 = vmatpush1.msra.mxu0 0.0
        %274 = vmatprep.subr.mxu0 0.0
        %275 = vmatpush1.msra.mxu0 0.0
        %276 = vmatprep.subr.mxu0 0.0
        %277 = vmatpush1.msra.mxu0 0.0
        %278 = vmatprep.subr.mxu0 0.0
        %279 = vmatpush1.msra.mxu0 0.0
        %280 = vmatprep.subr.mxu0 0.0
        %281 = vmatpush1.msra.mxu0 0.0
        %282 = vmatprep.subr.mxu0 0.0
        %283 = vmatpush1.msra.mxu0 0.0
        %284 = vmatprep.subr.mxu0 0.0
        %285 = vmatpush1.msra.mxu0 0.0
        %286 = vmatprep.subr.mxu0 0.0
        %287 = vmatpush1.msra.mxu0 0.0
        %288 = vmatprep.subr.mxu0 0.0
        %289 = vmatpush1.msra.mxu0 0.0
        %290 = vmatprep.subr.mxu0 0.0
        %291 = vmatpush1.msra.mxu0 0.0
        %292 = vmatprep.subr.mxu0 0.0
        %293 = vmatpush1.msra.mxu0 0.0
        %294 = vmatprep.subr.mxu0 0.0
        %295 = vmatpush1.msra.mxu0 0.0
        %296 = vmatprep.subr.mxu0 0.0
        %297 = vmatpush1.msra.mxu0 0.0
        %298 = vmatprep.subr.mxu0 0.0
        %299 = vmatpush1.msra.mxu0 0.0
        %300 = vmatprep.subr.mxu0 0.0
        %301 = vmatpush1.msra.mxu0 0.0
        %302 = vmatprep.subr.mxu0 0.0
        %303 = vmatpush1.msra.mxu0 0.0
        %304 = vmatprep.mubr.f32.mxu0 0.0
        %305 = vmatmul.mubr.f32.gmra.mrb[0].mxu0 %v234
        %v306 = vpop.f32.mrb[0].mxu0
        %v307 = vadd.f32 0.0, %v306
        %v308 = vpop.f32.mrb[0].mxu0
        %309 = vdwg.mxu0
        %v310 = vmul.f32 %v230, %v307
        %v311 = vadd.f32 %v310, 0.0
        %v312 = vadd.f32 %v307, 0.0
        %s313 = scalar_lea.vmem %s184, 2 [#allocation2]
        %v314 = vld [vmem:[%s313] sm:$0x3]
        %315 = vrot.lane.b32.xlu0 %v231, 124
        %v316 = vpop.permute.xlu0 %315
        %v317 = vsel %vm232, %v316, 0
        %319 = vmatprep.subr.mxu0 0.0
        %320 = vmatpush1.msra.mxu0 %v238
        %321 = vmatprep.subr.mxu0 0.0
        %322 = vmatpush1.msra.mxu0 0.0
        %323 = vmatprep.subr.mxu0 0.0
        %324 = vmatpush1.msra.mxu0 0.0
        %325 = vmatprep.subr.mxu0 0.0
        %326 = vmatpush1.msra.mxu0 0.0
        %327 = vmatprep.subr.mxu0 0.0
        %328 = vmatpush1.msra.mxu0 0.0
        %329 = vmatprep.subr.mxu0 0.0
        %330 = vmatpush1.msra.mxu0 0.0
        %331 = vmatprep.subr.mxu0 0.0
        %332 = vmatpush1.msra.mxu0 0.0
        %333 = vmatprep.subr.mxu0 0.0
        %334 = vmatpush1.msra.mxu0 0.0
        %335 = vmatprep.subr.mxu0 0.0
        %336 = vmatpush1.msra.mxu0 0.0
        %337 = vmatprep.subr.mxu0 0.0
        %338 = vmatpush1.msra.mxu0 0.0
        %339 = vmatprep.subr.mxu0 0.0
        %340 = vmatpush1.msra.mxu0 0.0
        %341 = vmatprep.subr.mxu0 0.0
        %342 = vmatpush1.msra.mxu0 0.0
        %343 = vmatprep.subr.mxu0 0.0
        %344 = vmatpush1.msra.mxu0 0.0
        %345 = vmatprep.subr.mxu0 0.0
        %346 = vmatpush1.msra.mxu0 0.0
        %347 = vmatprep.subr.mxu0 0.0
        %348 = vmatpush1.msra.mxu0 0.0
        %349 = vmatprep.subr.mxu0 0.0
        %350 = vmatpush1.msra.mxu0 0.0
        %351 = vmatprep.subr.mxu0 0.0
        %352 = vmatpush1.msra.mxu0 0.0
        %353 = vmatprep.subr.mxu0 0.0
        %354 = vmatpush1.msra.mxu0 0.0
        %355 = vmatprep.subr.mxu0 0.0
        %356 = vmatpush1.msra.mxu0 0.0
        %357 = vmatprep.subr.mxu0 0.0
        %358 = vmatpush1.msra.mxu0 0.0
        %359 = vmatprep.subr.mxu0 0.0
        %360 = vmatpush1.msra.mxu0 0.0
        %361 = vmatprep.subr.mxu0 0.0
        %362 = vmatpush1.msra.mxu0 0.0
        %363 = vmatprep.subr.mxu0 0.0
        %364 = vmatpush1.msra.mxu0 0.0
        %365 = vmatprep.subr.mxu0 0.0
        %366 = vmatpush1.msra.mxu0 0.0
        %367 = vmatprep.subr.mxu0 0.0
        %368 = vmatpush1.msra.mxu0 0.0
        %369 = vmatprep.subr.mxu0 0.0
        %370 = vmatpush1.msra.mxu0 0.0
        %371 = vmatprep.subr.mxu0 0.0
        %372 = vmatpush1.msra.mxu0 0.0
        %373 = vmatprep.subr.mxu0 0.0
        %374 = vmatpush1.msra.mxu0 0.0
        %375 = vmatprep.subr.mxu0 0.0
        %376 = vmatpush1.msra.mxu0 0.0
        %377 = vmatprep.subr.mxu0 0.0
        %378 = vmatpush1.msra.mxu0 0.0
        %379 = vmatprep.subr.mxu0 0.0
        %380 = vmatpush1.msra.mxu0 0.0
        %381 = vmatprep.subr.mxu0 0.0
        %382 = vmatpush1.msra.mxu0 0.0
        %383 = vmatprep.mubr.f32.mxu0 0.0
        %384 = vmatmul.mubr.f32.gmra.mrb[0].mxu0 %v317
        %v385 = vpop.f32.mrb[0].mxu0
        %v386 = vadd.f32 0.0, %v385
        %v387 = vpop.f32.mrb[0].mxu0
        %388 = vdwg.mxu0
        %v389 = vmul.f32 %v314, %v386
        %v390 = vadd.f32 %v311, %v389
        %v391 = vadd.f32 %v312, %v386
        %s392 = scalar_lea.vmem %s184, 4 [#allocation2]
        %v393 = vld [vmem:[%s392] sm:$0x3]
        %394 = vrot.lane.b32.xlu0 %v231, 120
        %v395 = vpop.permute.xlu0 %394
        %v396 = vsel %vm232, %v395, 0
        %398 = vmatprep.subr.mxu0 0.0
        %399 = vmatpush1.msra.mxu0 %v238
        %400 = vmatprep.subr.mxu0 0.0
        %401 = vmatpush1.msra.mxu0 0.0
        %402 = vmatprep.subr.mxu0 0.0
        %403 = vmatpush1.msra.mxu0 0.0
        %404 = vmatprep.subr.mxu0 0.0
        %405 = vmatpush1.msra.mxu0 0.0
        %406 = vmatprep.subr.mxu0 0.0
        %407 = vmatpush1.msra.mxu0 0.0
        %408 = vmatprep.subr.mxu0 0.0
        %409 = vmatpush1.msra.mxu0 0.0
        %410 = vmatprep.subr.mxu0 0.0
        %411 = vmatpush1.msra.mxu0 0.0
        %412 = vmatprep.subr.mxu0 0.0
        %413 = vmatpush1.msra.mxu0 0.0
        %414 = vmatprep.subr.mxu0 0.0
        %415 = vmatpush1.msra.mxu0 0.0
        %416 = vmatprep.subr.mxu0 0.0
        %417 = vmatpush1.msra.mxu0 0.0
        %418 = vmatprep.subr.mxu0 0.0
        %419 = vmatpush1.msra.mxu0 0.0
        %420 = vmatprep.subr.mxu0 0.0
        %421 = vmatpush1.msra.mxu0 0.0
        %422 = vmatprep.subr.mxu0 0.0
        %423 = vmatpush1.msra.mxu0 0.0
        %424 = vmatprep.subr.mxu0 0.0
        %425 = vmatpush1.msra.mxu0 0.0
        %426 = vmatprep.subr.mxu0 0.0
        %427 = vmatpush1.msra.mxu0 0.0
        %428 = vmatprep.subr.mxu0 0.0
        %429 = vmatpush1.msra.mxu0 0.0
        %430 = vmatprep.subr.mxu0 0.0
        %431 = vmatpush1.msra.mxu0 0.0
        %432 = vmatprep.subr.mxu0 0.0
        %433 = vmatpush1.msra.mxu0 0.0
        %434 = vmatprep.subr.mxu0 0.0
        %435 = vmatpush1.msra.mxu0 0.0
        %436 = vmatprep.subr.mxu0 0.0
        %437 = vmatpush1.msra.mxu0 0.0
        %438 = vmatprep.subr.mxu0 0.0
        %439 = vmatpush1.msra.mxu0 0.0
        %440 = vmatprep.subr.mxu0 0.0
        %441 = vmatpush1.msra.mxu0 0.0
        %442 = vmatprep.subr.mxu0 0.0
        %443 = vmatpush1.msra.mxu0 0.0
        %444 = vmatprep.subr.mxu0 0.0
        %445 = vmatpush1.msra.mxu0 0.0
        %446 = vmatprep.subr.mxu0 0.0
        %447 = vmatpush1.msra.mxu0 0.0
        %448 = vmatprep.subr.mxu0 0.0
        %449 = vmatpush1.msra.mxu0 0.0
        %450 = vmatprep.subr.mxu0 0.0
        %451 = vmatpush1.msra.mxu0 0.0
        %452 = vmatprep.subr.mxu0 0.0
        %453 = vmatpush1.msra.mxu0 0.0
        %454 = vmatprep.subr.mxu0 0.0
        %455 = vmatpush1.msra.mxu0 0.0
        %456 = vmatprep.subr.mxu0 0.0
        %457 = vmatpush1.msra.mxu0 0.0
        %458 = vmatprep.subr.mxu0 0.0
        %459 = vmatpush1.msra.mxu0 0.0
        %460 = vmatprep.subr.mxu0 0.0
        %461 = vmatpush1.msra.mxu0 0.0
        %462 = vmatprep.mubr.f32.mxu0 0.0
        %463 = vmatmul.mubr.f32.gmra.mrb[0].mxu0 %v396
        %v464 = vpop.f32.mrb[0].mxu0
        %v465 = vadd.f32 0.0, %v464
        %v466 = vpop.f32.mrb[0].mxu0
        %467 = vdwg.mxu0
        %v468 = vmul.f32 %v393, %v465
        %v469 = vadd.f32 %v390, %v468
        %v470 = vadd.f32 %v391, %v465
        %s471 = scalar_lea.vmem %s184, 6 [#allocation2]
        %v472 = vld [vmem:[%s471] sm:$0x3]
        %473 = vrot.lane.b32.xlu0 %v231, 116
        %v474 = vpop.permute.xlu0 %473
        %v475 = vsel %vm232, %v474, 0
        %477 = vmatprep.subr.mxu0 0.0
        %478 = vmatpush1.msra.mxu0 %v238
        %479 = vmatprep.subr.mxu0 0.0
        %480 = vmatpush1.msra.mxu0 0.0
        %481 = vmatprep.subr.mxu0 0.0
        %482 = vmatpush1.msra.mxu0 0.0
        %483 = vmatprep.subr.mxu0 0.0
        %484 = vmatpush1.msra.mxu0 0.0
        %485 = vmatprep.subr.mxu0 0.0
        %486 = vmatpush1.msra.mxu0 0.0
        %487 = vmatprep.subr.mxu0 0.0
        %488 = vmatpush1.msra.mxu0 0.0
        %489 = vmatprep.subr.mxu0 0.0
        %490 = vmatpush1.msra.mxu0 0.0
        %491 = vmatprep.subr.mxu0 0.0
        %492 = vmatpush1.msra.mxu0 0.0
        %493 = vmatprep.subr.mxu0 0.0
        %494 = vmatpush1.msra.mxu0 0.0
        %495 = vmatprep.subr.mxu0 0.0
        %496 = vmatpush1.msra.mxu0 0.0
        %497 = vmatprep.subr.mxu0 0.0
        %498 = vmatpush1.msra.mxu0 0.0
        %499 = vmatprep.subr.mxu0 0.0
        %500 = vmatpush1.msra.mxu0 0.0
        %501 = vmatprep.subr.mxu0 0.0
        %502 = vmatpush1.msra.mxu0 0.0
        %503 = vmatprep.subr.mxu0 0.0
        %504 = vmatpush1.msra.mxu0 0.0
        %505 = vmatprep.subr.mxu0 0.0
        %506 = vmatpush1.msra.mxu0 0.0
        %507 = vmatprep.subr.mxu0 0.0
        %508 = vmatpush1.msra.mxu0 0.0
        %509 = vmatprep.subr.mxu0 0.0
        %510 = vmatpush1.msra.mxu0 0.0
        %511 = vmatprep.subr.mxu0 0.0
        %512 = vmatpush1.msra.mxu0 0.0
        %513 = vmatprep.subr.mxu0 0.0
        %514 = vmatpush1.msra.mxu0 0.0
        %515 = vmatprep.subr.mxu0 0.0
        %516 = vmatpush1.msra.mxu0 0.0
        %517 = vmatprep.subr.mxu0 0.0
        %518 = vmatpush1.msra.mxu0 0.0
        %519 = vmatprep.subr.mxu0 0.0
        %520 = vmatpush1.msra.mxu0 0.0
        %521 = vmatprep.subr.mxu0 0.0
        %522 = vmatpush1.msra.mxu0 0.0
        %523 = vmatprep.subr.mxu0 0.0
        %524 = vmatpush1.msra.mxu0 0.0
        %525 = vmatprep.subr.mxu0 0.0
        %526 = vmatpush1.msra.mxu0 0.0
        %527 = vmatprep.subr.mxu0 0.0
        %528 = vmatpush1.msra.mxu0 0.0
        %529 = vmatprep.subr.mxu0 0.0
        %530 = vmatpush1.msra.mxu0 0.0
        %531 = vmatprep.subr.mxu0 0.0
        %532 = vmatpush1.msra.mxu0 0.0
        %533 = vmatprep.subr.mxu0 0.0
        %534 = vmatpush1.msra.mxu0 0.0
        %535 = vmatprep.subr.mxu0 0.0
        %536 = vmatpush1.msra.mxu0 0.0
        %537 = vmatprep.subr.mxu0 0.0
        %538 = vmatpush1.msra.mxu0 0.0
        %539 = vmatprep.subr.mxu0 0.0
        %540 = vmatpush1.msra.mxu0 0.0
        %541 = vmatprep.mubr.f32.mxu0 0.0
        %542 = vmatmul.mubr.f32.gmra.mrb[0].mxu0 %v475
        %v543 = vpop.f32.mrb[0].mxu0
        %v544 = vadd.f32 0.0, %v543
        %v545 = vpop.f32.mrb[0].mxu0
        %546 = vdwg.mxu0
        %v547 = vmul.f32 %v472, %v544
        %v548 = vadd.f32 %v469, %v547
        %v549 = vadd.f32 %v470, %v544
        %v550 = vrcp.pop %v549
        %v551 = vmul.f32 %v548, %v550
        %552 = vst [vmem:[%s218] sm:$0x3] %v551
        %s553 = sand.u32 %s100, 1
        %s554 = scalar_lea.sflag [#allocation4], %s553
        %s555 = sand.u32 %s100, 1
        %s556 = smul.addr %s555, 2
        %s557 = scalar_lea.vmem [#allocation7], %s556
        // Predicated region
        $region37: #{tpu_custom_call.1} parent=27 // pred_check
          %p558 = pneg %p110
        $region38: #{tpu_custom_call.1} parent=27 // pred_check_branch
          %560 = sbr.rel (%p558) target = $region40
        $region39: #{tpu_custom_call.1} parent=27 // pred_region
          %s562 = ssub.s32 32, 32
          %563 = vsyncadd %s554, %s562
          %s564 = sadd.s32 %s27, %s26
          %s565 = smul.addr %s564, 32
          %s566 = scalar_lea.hbm %s2, %s565
          %s568 = sshll.u32 %s557, 4
          %s569 = int_to_ptr.vmem [resolvable:$true] %s568
          %571 = dma.vmem_to_hbm [thread:$0]  %s569, 32, %s566, %s554
        $region40: #{tpu_custom_call.1} parent=27 // pred_fallthru
          _
      $region28: #{tpu_custom_call.1} parent=5 // pred_fallthru
        _
      %p572 = scmp.le.s32.totalorder 2, %s17
      // Predicated region
      $region41: #{tpu_custom_call.1} parent=5 // pred_check
        %p573 = pneg %p572
      $region42: #{tpu_custom_call.1} parent=5 // pred_check_branch
        %575 = sbr.rel (%p573) target = $region44
      $region43: #{tpu_custom_call.1} parent=5 // pred_region
        %s576 = ssub.s32 %s17, 2
        // Predicated region
        $region45: #{tpu_custom_call.1} parent=43 // pred_check
          %p577 = pneg %p116
        $region46: #{tpu_custom_call.1} parent=43 // pred_check_branch
          %579 = sbr.rel (%p577) target = $region48
        $region47: #{tpu_custom_call.1} parent=43 // pred_region
          %s580 = sand.u32 %s101, 1
          %s581 = scalar_lea.sflag [#allocation4], %s580
          %s582 = sand.u32 %s101, 1
          %s583 = smul.addr %s582, 2
          %s584 = scalar_lea.vmem [#allocation7], %s583
          %585 = dma.done %s581, 32
        $region48: #{tpu_custom_call.1} parent=43 // pred_fallthru
          _
      $region44: #{tpu_custom_call.1} parent=5 // pred_fallthru
        _
    $region6: #{tpu_custom_call.1} parent=1 // loop_footer
      %s21 = sadd.s32 1, %s17
    $region7: #{tpu_custom_call.1} parent=1 // loop_footer_branch
      %16 = sbr.rel target = $region3
    $region8: #{tpu_custom_call.1} parent=1 // loop_exit
      _
    %586 = vsyncpa [#allocation3], 1
    %s587 = scalar_lea.sflag [#allocation3], 1
    %588 = vsyncpa %s587, 1
    %589 = vsyncpa [#allocation6], 1
    %s590 = scalar_lea.sflag [#allocation6], 1
    %591 = vsyncpa %s590, 1
    %592 = vsyncpa [#allocation4], 1
    %s593 = scalar_lea.sflag [#allocation4], 1
    %594 = vsyncpa %s593, 1

</llo_original>
